<compile_context>
chip_gen: v5e
topology: v5e:2x2
jax: 0.10.0
libtpu: 0.0.40
codegen_flags: <defaults>
</compile_context>

<pallas_src>
import functools

import jax
import jax.numpy as jnp
from jax import lax
from jax.experimental import pallas as pl
from jax.experimental.pallas import tpu as pltpu


# ----------------------------------------------------------------------------
# Fused Pallas kernel: all TemporalBlocks + linear head + log_softmax.
# Processes one batch element per grid step; all activations stay in VMEM.
#
# Ref order: x_ref, then per level [w1, b1, w2, b2, (wd, bd if downsample)],
# then lin_w, lin_b, then o_ref.
# ----------------------------------------------------------------------------
def _tcn_fused_kernel(*refs, cfg, ksize, seq_len):
    refs = list(refs)
    x_ref = refs[0]
    o_ref = refs[-1]
    L = seq_len

    x = x_ref[0].astype(jnp.float32)                      # (L, Cin)

    def causal_conv(h, w_ref, b_ref, dilation):
        # One fused matmul: slab (L, K*Cin) @ w (K*Cin, Cout).
        cin = h.shape[1]
        pad = (ksize - 1) * dilation
        if pad > 0:
            hp = jnp.concatenate(
                [jnp.zeros((pad, cin), jnp.float32), h], axis=0)   # (pad+L, Cin)
        else:
            hp = h
        if ksize > 1:
            cols = []
            for k in range(ksize):
                start = pad - (ksize - 1 - k) * dilation           # static
                cols.append(hp[start:start + L, :])
            slab = jnp.concatenate(cols, axis=-1)                  # (L, K*Cin)
        else:
            slab = hp
        out = jnp.dot(slab, w_ref[...], preferred_element_type=jnp.float32)
        return out + b_ref[...]                                    # (1, Cout) bcast

    widx = 1
    for (dilation, has_ds) in cfg:
        w1_ref, b1_ref, w2_ref, b2_ref = refs[widx:widx + 4]
        widx += 4
        if has_ds:
            wd_ref, bd_ref = refs[widx:widx + 2]
            widx += 2

        h1 = jnp.maximum(causal_conv(x, w1_ref, b1_ref, dilation), 0.0)  # ReLU
        h2 = jnp.maximum(causal_conv(h1, w2_ref, b2_ref, dilation), 0.0)

        if has_ds:
            res = jnp.dot(x, wd_ref[...],
                          preferred_element_type=jnp.float32) + bd_ref[...]
        else:
            res = x                                # identity residual: no matmul
        x = jnp.maximum(h2 + res, 0.0)

    lin_w_ref, lin_b_ref = refs[widx:widx + 2]

    # Head on the last timestep only (y1[:, :, -1] in NCL terms).
    y_last = x[L - 1:L, :]                                         # (1, C_last)
    logits = jnp.dot(y_last, lin_w_ref[...],
                     preferred_element_type=jnp.float32) + lin_b_ref[...]
    m = jnp.max(logits, axis=-1, keepdims=True)
    lse = m + jnp.log(jnp.sum(jnp.exp(logits - m), axis=-1, keepdims=True))
    o_ref[0] = (logits - lse).astype(o_ref.dtype)                  # (1, O)


def tcn_forward_pallas(inputs_ncl, params, lin_w, lin_b, ksize):
    # inputs_ncl: (N, C_in, L) -> NLC so channels are the lane (last) dim.
    x = jnp.transpose(inputs_ncl, (0, 2, 1)).astype(jnp.float32)   # (N, L, Cin)
    N, L, Cin = x.shape
    O = lin_w.shape[1]

    flat_args = [x]
    in_specs = [pl.BlockSpec((1, L, Cin), lambda n: (n, 0, 0))]

    def add_weight(a):
        flat_args.append(a)
        in_specs.append(pl.BlockSpec(a.shape, lambda n, _nd=a.ndim: (0,) * _nd))

    cfg = []
    for p in params:
        K, ci, co = p["w1"].shape
        has_ds = p["wd"] is not None
        cfg.append((p["dilation"], has_ds))
        add_weight(p["w1"].reshape(K * ci, co))    # (K*Cin, Cout) fused-conv layout
        add_weight(p["b1"])
        add_weight(p["w2"].reshape(K * co, co))
        add_weight(p["b2"])
        if has_ds:
            add_weight(p["wd"])
            add_weight(p["bd"])
    add_weight(lin_w)
    add_weight(lin_b)

    kernel = functools.partial(_tcn_fused_kernel,
                               cfg=tuple(cfg), ksize=ksize, seq_len=L)
    out = pl.pallas_call(
        kernel,
        out_shape=jax.ShapeDtypeStruct((N, 1, O), jnp.float32),
        grid=(N,),
        in_specs=in_specs,
        out_specs=pl.BlockSpec((1, 1, O), lambda n: (n, 0, 0)),
        compiler_params=pltpu.CompilerParams(
            dimension_semantics=("parallel",)),    # lets v7x use both TCs
    )(*flat_args)
    return out[:, 0, :]                                            # (N, O)


# ----------------------------------------------------------------------------
# Parameter construction (deterministic, synthetic) + weight_norm folding
# ----------------------------------------------------------------------------
def _fold_weight_norm(v_kic):
    # v_kic: (K, Cin, Cout). weight_norm(dim=0) in PyTorch layout (Cout,Cin,K)
    # => per-output-channel norm; default g init = ||v||, so w_eff == v, but we
    # compute it explicitly to mirror the op.
    norm = jnp.sqrt(jnp.sum(v_kic ** 2, axis=(0, 1), keepdims=True))  # (1,1,Cout)
    g = norm
    return g * v_kic / norm


def make_tcn_params(key, input_size, num_channels, output_size, ksize):
    params = []
    in_ch = input_size
    for i, out_ch in enumerate(num_channels):
        key, k1, k2, k3, k4, k5, k6 = jax.random.split(key, 7)
        v1 = 0.01 * jax.random.normal(k1, (ksize, in_ch, out_ch), jnp.float32)
        v2 = 0.01 * jax.random.normal(k2, (ksize, out_ch, out_ch), jnp.float32)
        w1 = _fold_weight_norm(v1)
        w2 = _fold_weight_norm(v2)
        b1 = 0.1 * jax.random.normal(k3, (1, out_ch), jnp.float32)
        b2 = 0.1 * jax.random.normal(k4, (1, out_ch), jnp.float32)
        if in_ch != out_ch:
            wd = 0.01 * jax.random.normal(k5, (in_ch, out_ch), jnp.float32)
            bd = 0.1 * jax.random.normal(k6, (1, out_ch), jnp.float32)
        else:
            wd = None                              # identity residual: no weights
            bd = None
        params.append(dict(w1=w1, b1=b1, w2=w2, b2=b2, wd=wd, bd=bd,
                           dilation=2 ** i))
        in_ch = out_ch
    key, kl1, kl2 = jax.random.split(key, 3)
    lin_w = 0.1 * jax.random.normal(kl1, (num_channels[-1], output_size), jnp.float32)
    lin_b = 0.1 * jax.random.normal(kl2, (1, output_size), jnp.float32)
    return params, lin_w, lin_b


# ----------------------------------------------------------------------------
# Pure-JAX reference (conv + Chomp1d) for validation
# ----------------------------------------------------------------------------
def tcn_forward_reference(inputs_ncl, params, lin_w, lin_b, ksize):
    x = inputs_ncl.astype(jnp.float32)             # NCL
    for p in params:
        d = p["dilation"]
        pad = (ksize - 1) * d

        def conv(inp, w_kic, b):
            w_oik = jnp.transpose(w_kic, (2, 1, 0))          # (Cout, Cin, K)
            y = lax.conv_general_dilated(
                inp, w_oik, window_strides=(1,), padding=[(pad, pad)],
                rhs_dilation=(d,),
                dimension_numbers=("NCH", "OIH", "NCH"))
            y = y[:, :, : inp.shape[2]]                      # Chomp1d
            return y + b[0][None, :, None]

        h = jax.nn.relu(conv(x, p["w1"], p["b1"]))
        h = jax.nn.relu(conv(h, p["w2"], p["b2"]))
        if p["wd"] is not None:
            res = jnp.einsum("ncl,co->nol", x, p["wd"]) + p["bd"][0][None, :, None]
        else:
            res = x
        x = jax.nn.relu(h + res)
    logits = x[:, :, -1] @ lin_w + lin_b[0][None, :]
    return jax.nn.log_softmax(logits, axis=1)


# ----------------------------------------------------------------------------
if __name__ == "__main__":
    # Small shapes consistent with the forward: inputs (N, C_in, L)
    N, C_IN, L = 2, 4, 16
    NUM_CHANNELS = [16, 16, 16]       # 3 levels, dilations 1, 2, 4
    OUTPUT_SIZE = 8
    KSIZE = 2                         # args.ksize

    key = jax.random.PRNGKey(0)
    key, kx = jax.random.split(key)
    inputs = jax.random.normal(kx, (N, C_IN, L), jnp.float32)

    params, lin_w, lin_b = make_tcn_params(key, C_IN, NUM_CHANNELS, OUTPUT_SIZE, KSIZE)

    out = tcn_forward_pallas(inputs, params, lin_w, lin_b, KSIZE)
    out = jax.block_until_ready(out)

    ref = tcn_forward_reference(inputs, params, lin_w, lin_b, KSIZE)
    ref = jax.block_until_ready(ref)

    assert out.shape == (N, OUTPUT_SIZE)
    assert jnp.allclose(out, ref, atol=1e-5, rtol=1e-5), (
        f"mismatch: max abs err {jnp.max(jnp.abs(out - ref))}")

    print("KERNEL_OK")
</pallas_src>

<mosaic_0001>
module attributes {stable_mosaic.version = 11 : i64} {
  func.func @_tcn_fused_kernel(%arg0: i32, %arg1: memref<1x16x4xf32, #tpu.memory_space<vmem>>, %arg2: memref<8x16xf32, #tpu.memory_space<vmem>>, %arg3: memref<1x16xf32, #tpu.memory_space<vmem>>, %arg4: memref<32x16xf32, #tpu.memory_space<vmem>>, %arg5: memref<1x16xf32, #tpu.memory_space<vmem>>, %arg6: memref<4x16xf32, #tpu.memory_space<vmem>>, %arg7: memref<1x16xf32, #tpu.memory_space<vmem>>, %arg8: memref<32x16xf32, #tpu.memory_space<vmem>>, %arg9: memref<1x16xf32, #tpu.memory_space<vmem>>, %arg10: memref<32x16xf32, #tpu.memory_space<vmem>>, %arg11: memref<1x16xf32, #tpu.memory_space<vmem>>, %arg12: memref<32x16xf32, #tpu.memory_space<vmem>>, %arg13: memref<1x16xf32, #tpu.memory_space<vmem>>, %arg14: memref<32x16xf32, #tpu.memory_space<vmem>>, %arg15: memref<1x16xf32, #tpu.memory_space<vmem>>, %arg16: memref<16x8xf32, #tpu.memory_space<vmem>>, %arg17: memref<1x8xf32, #tpu.memory_space<vmem>>, %arg18: memref<1x1x8xf32, #tpu.memory_space<vmem>>) attributes {dimension_semantics = [#tpu.dimension_semantics<parallel>], iteration_bounds = array<i64: 2>, scalar_prefetch = 0 : i64, scratch_operands = 0 : i64, tpu.core_type = #tpu.core_type<tc>, window_params = [{transform_indices = @transform_0, window_bounds = array<i64: 1, 16, 4>}, {pipeline_mode = #tpu.pipeline_mode<synchronous>, transform_indices = @transform_1, window_bounds = array<i64: 8, 16>}, {pipeline_mode = #tpu.pipeline_mode<synchronous>, transform_indices = @transform_2, window_bounds = array<i64: 1, 16>}, {pipeline_mode = #tpu.pipeline_mode<synchronous>, transform_indices = @transform_3, window_bounds = array<i64: 32, 16>}, {pipeline_mode = #tpu.pipeline_mode<synchronous>, transform_indices = @transform_4, window_bounds = array<i64: 1, 16>}, {pipeline_mode = #tpu.pipeline_mode<synchronous>, transform_indices = @transform_5, window_bounds = array<i64: 4, 16>}, {pipeline_mode = #tpu.pipeline_mode<synchronous>, transform_indices = @transform_6, window_bounds = array<i64: 1, 16>}, {pipeline_mode = #tpu.pipeline_mode<synchronous>, transform_indices = @transform_7, window_bounds = array<i64: 32, 16>}, {pipeline_mode = #tpu.pipeline_mode<synchronous>, transform_indices = @transform_8, window_bounds = array<i64: 1, 16>}, {pipeline_mode = #tpu.pipeline_mode<synchronous>, transform_indices = @transform_9, window_bounds = array<i64: 32, 16>}, {pipeline_mode = #tpu.pipeline_mode<synchronous>, transform_indices = @transform_10, window_bounds = array<i64: 1, 16>}, {pipeline_mode = #tpu.pipeline_mode<synchronous>, transform_indices = @transform_11, window_bounds = array<i64: 32, 16>}, {pipeline_mode = #tpu.pipeline_mode<synchronous>, transform_indices = @transform_12, window_bounds = array<i64: 1, 16>}, {pipeline_mode = #tpu.pipeline_mode<synchronous>, transform_indices = @transform_13, window_bounds = array<i64: 32, 16>}, {pipeline_mode = #tpu.pipeline_mode<synchronous>, transform_indices = @transform_14, window_bounds = array<i64: 1, 16>}, {pipeline_mode = #tpu.pipeline_mode<synchronous>, transform_indices = @transform_15, window_bounds = array<i64: 16, 8>}, {pipeline_mode = #tpu.pipeline_mode<synchronous>, transform_indices = @transform_16, window_bounds = array<i64: 1, 8>}, {transform_indices = @transform_17, window_bounds = array<i64: 1, 1, 8>}]} {
    %c0 = arith.constant 0 : index
    %c0_0 = arith.constant 0 : index
    %c0_1 = arith.constant 0 : index
    %0 = vector.load %arg1[%c0, %c0_0, %c0_1] : memref<1x16x4xf32, #tpu.memory_space<vmem>>, vector<1x16x4xf32>
    %1 = vector.shape_cast %0 : vector<1x16x4xf32> to vector<16x4xf32>
    %cst = arith.constant 0.000000e+00 : f32
    %2 = vector.broadcast %cst : f32 to vector<1x4xf32>
    %3 = tpu.concatenate %2, %1 in 0 : vector<1x4xf32>, vector<16x4xf32> -> vector<17x4xf32>
    %4 = vector.extract_strided_slice %3 {offsets = [0, 0], sizes = [16, 4], strides = [1, 1]} : vector<17x4xf32> to vector<16x4xf32>
    %5 = vector.extract_strided_slice %3 {offsets = [1, 0], sizes = [16, 4], strides = [1, 1]} : vector<17x4xf32> to vector<16x4xf32>
    %6 = tpu.concatenate %4, %5 in 1 : vector<16x4xf32>, vector<16x4xf32> -> vector<16x8xf32>
    %c0_2 = arith.constant 0 : index
    %c0_3 = arith.constant 0 : index
    %7 = vector.load %arg2[%c0_2, %c0_3] : memref<8x16xf32, #tpu.memory_space<vmem>>, vector<8x16xf32>
    %cst_4 = arith.constant dense<0.000000e+00> : vector<16x16xf32>
    %8 = tpu.matmul %6, %7, %cst_4 {dimension_numbers = #tpu.dot_dimension_numbers<[1], [0], [0], [1], [0, 0, 1, 1], [], []>} : vector<16x8xf32>, vector<8x16xf32>, vector<16x16xf32> -> vector<16x16xf32>
    %c0_5 = arith.constant 0 : index
    %c0_6 = arith.constant 0 : index
    %9 = vector.load %arg3[%c0_5, %c0_6] : memref<1x16xf32, #tpu.memory_space<vmem>>, vector<1x16xf32>
    %10 = vector.broadcast %9 : vector<1x16xf32> to vector<16x16xf32>
    %11 = arith.addf %8, %10 : vector<16x16xf32>
    %cst_7 = arith.constant 0.000000e+00 : f32
    %12 = vector.broadcast %cst_7 : f32 to vector<16x16xf32>
    %13 = arith.maximumf %11, %12 : vector<16x16xf32>
    %cst_8 = arith.constant 0.000000e+00 : f32
    %14 = vector.broadcast %cst_8 : f32 to vector<1x16xf32>
    %15 = tpu.concatenate %14, %13 in 0 : vector<1x16xf32>, vector<16x16xf32> -> vector<17x16xf32>
    %16 = vector.extract_strided_slice %15 {offsets = [0, 0], sizes = [16, 16], strides = [1, 1]} : vector<17x16xf32> to vector<16x16xf32>
    %17 = vector.extract_strided_slice %15 {offsets = [1, 0], sizes = [16, 16], strides = [1, 1]} : vector<17x16xf32> to vector<16x16xf32>
    %18 = tpu.concatenate %16, %17 in 1 : vector<16x16xf32>, vector<16x16xf32> -> vector<16x32xf32>
    %c0_9 = arith.constant 0 : index
    %c0_10 = arith.constant 0 : index
    %19 = vector.load %arg4[%c0_9, %c0_10] : memref<32x16xf32, #tpu.memory_space<vmem>>, vector<32x16xf32>
    %cst_11 = arith.constant dense<0.000000e+00> : vector<16x16xf32>
    %20 = tpu.matmul %18, %19, %cst_11 {dimension_numbers = #tpu.dot_dimension_numbers<[1], [0], [0], [1], [0, 0, 1, 1], [], []>} : vector<16x32xf32>, vector<32x16xf32>, vector<16x16xf32> -> vector<16x16xf32>
    %c0_12 = arith.constant 0 : index
    %c0_13 = arith.constant 0 : index
    %21 = vector.load %arg5[%c0_12, %c0_13] : memref<1x16xf32, #tpu.memory_space<vmem>>, vector<1x16xf32>
    %22 = vector.broadcast %21 : vector<1x16xf32> to vector<16x16xf32>
    %23 = arith.addf %20, %22 : vector<16x16xf32>
    %cst_14 = arith.constant 0.000000e+00 : f32
    %24 = vector.broadcast %cst_14 : f32 to vector<16x16xf32>
    %25 = arith.maximumf %23, %24 : vector<16x16xf32>
    %c0_15 = arith.constant 0 : index
    %c0_16 = arith.constant 0 : index
    %26 = vector.load %arg6[%c0_15, %c0_16] : memref<4x16xf32, #tpu.memory_space<vmem>>, vector<4x16xf32>
    %cst_17 = arith.constant dense<0.000000e+00> : vector<16x16xf32>
    %27 = tpu.matmul %1, %26, %cst_17 {dimension_numbers = #tpu.dot_dimension_numbers<[1], [0], [0], [1], [0, 0, 1, 1], [], []>} : vector<16x4xf32>, vector<4x16xf32>, vector<16x16xf32> -> vector<16x16xf32>
    %c0_18 = arith.constant 0 : index
    %c0_19 = arith.constant 0 : index
    %28 = vector.load %arg7[%c0_18, %c0_19] : memref<1x16xf32, #tpu.memory_space<vmem>>, vector<1x16xf32>
    %29 = vector.broadcast %28 : vector<1x16xf32> to vector<16x16xf32>
    %30 = arith.addf %27, %29 : vector<16x16xf32>
    %31 = arith.addf %25, %30 : vector<16x16xf32>
    %cst_20 = arith.constant 0.000000e+00 : f32
    %32 = vector.broadcast %cst_20 : f32 to vector<16x16xf32>
    %33 = arith.maximumf %31, %32 : vector<16x16xf32>
    %cst_21 = arith.constant 0.000000e+00 : f32
    %34 = vector.broadcast %cst_21 : f32 to vector<2x16xf32>
    %35 = tpu.concatenate %34, %33 in 0 : vector<2x16xf32>, vector<16x16xf32> -> vector<18x16xf32>
    %36 = vector.extract_strided_slice %35 {offsets = [0, 0], sizes = [16, 16], strides = [1, 1]} : vector<18x16xf32> to vector<16x16xf32>
    %37 = vector.extract_strided_slice %35 {offsets = [2, 0], sizes = [16, 16], strides = [1, 1]} : vector<18x16xf32> to vector<16x16xf32>
    %38 = tpu.concatenate %36, %37 in 1 : vector<16x16xf32>, vector<16x16xf32> -> vector<16x32xf32>
    %c0_22 = arith.constant 0 : index
    %c0_23 = arith.constant 0 : index
    %39 = vector.load %arg8[%c0_22, %c0_23] : memref<32x16xf32, #tpu.memory_space<vmem>>, vector<32x16xf32>
    %cst_24 = arith.constant dense<0.000000e+00> : vector<16x16xf32>
    %40 = tpu.matmul %38, %39, %cst_24 {dimension_numbers = #tpu.dot_dimension_numbers<[1], [0], [0], [1], [0, 0, 1, 1], [], []>} : vector<16x32xf32>, vector<32x16xf32>, vector<16x16xf32> -> vector<16x16xf32>
    %c0_25 = arith.constant 0 : index
    %c0_26 = arith.constant 0 : index
    %41 = vector.load %arg9[%c0_25, %c0_26] : memref<1x16xf32, #tpu.memory_space<vmem>>, vector<1x16xf32>
    %42 = vector.broadcast %41 : vector<1x16xf32> to vector<16x16xf32>
    %43 = arith.addf %40, %42 : vector<16x16xf32>
    %cst_27 = arith.constant 0.000000e+00 : f32
    %44 = vector.broadcast %cst_27 : f32 to vector<16x16xf32>
    %45 = arith.maximumf %43, %44 : vector<16x16xf32>
    %cst_28 = arith.constant 0.000000e+00 : f32
    %46 = vector.broadcast %cst_28 : f32 to vector<2x16xf32>
    %47 = tpu.concatenate %46, %45 in 0 : vector<2x16xf32>, vector<16x16xf32> -> vector<18x16xf32>
    %48 = vector.extract_strided_slice %47 {offsets = [0, 0], sizes = [16, 16], strides = [1, 1]} : vector<18x16xf32> to vector<16x16xf32>
    %49 = vector.extract_strided_slice %47 {offsets = [2, 0], sizes = [16, 16], strides = [1, 1]} : vector<18x16xf32> to vector<16x16xf32>
    %50 = tpu.concatenate %48, %49 in 1 : vector<16x16xf32>, vector<16x16xf32> -> vector<16x32xf32>
    %c0_29 = arith.constant 0 : index
    %c0_30 = arith.constant 0 : index
    %51 = vector.load %arg10[%c0_29, %c0_30] : memref<32x16xf32, #tpu.memory_space<vmem>>, vector<32x16xf32>
    %cst_31 = arith.constant dense<0.000000e+00> : vector<16x16xf32>
    %52 = tpu.matmul %50, %51, %cst_31 {dimension_numbers = #tpu.dot_dimension_numbers<[1], [0], [0], [1], [0, 0, 1, 1], [], []>} : vector<16x32xf32>, vector<32x16xf32>, vector<16x16xf32> -> vector<16x16xf32>
    %c0_32 = arith.constant 0 : index
    %c0_33 = arith.constant 0 : index
    %53 = vector.load %arg11[%c0_32, %c0_33] : memref<1x16xf32, #tpu.memory_space<vmem>>, vector<1x16xf32>
    %54 = vector.broadcast %53 : vector<1x16xf32> to vector<16x16xf32>
    %55 = arith.addf %52, %54 : vector<16x16xf32>
    %cst_34 = arith.constant 0.000000e+00 : f32
    %56 = vector.broadcast %cst_34 : f32 to vector<16x16xf32>
    %57 = arith.maximumf %55, %56 : vector<16x16xf32>
    %58 = arith.addf %57, %33 : vector<16x16xf32>
    %cst_35 = arith.constant 0.000000e+00 : f32
    %59 = vector.broadcast %cst_35 : f32 to vector<16x16xf32>
    %60 = arith.maximumf %58, %59 : vector<16x16xf32>
    %cst_36 = arith.constant 0.000000e+00 : f32
    %61 = vector.broadcast %cst_36 : f32 to vector<4x16xf32>
    %62 = tpu.concatenate %61, %60 in 0 : vector<4x16xf32>, vector<16x16xf32> -> vector<20x16xf32>
    %63 = vector.extract_strided_slice %62 {offsets = [0, 0], sizes = [16, 16], strides = [1, 1]} : vector<20x16xf32> to vector<16x16xf32>
    %64 = vector.extract_strided_slice %62 {offsets = [4, 0], sizes = [16, 16], strides = [1, 1]} : vector<20x16xf32> to vector<16x16xf32>
    %65 = tpu.concatenate %63, %64 in 1 : vector<16x16xf32>, vector<16x16xf32> -> vector<16x32xf32>
    %c0_37 = arith.constant 0 : index
    %c0_38 = arith.constant 0 : index
    %66 = vector.load %arg12[%c0_37, %c0_38] : memref<32x16xf32, #tpu.memory_space<vmem>>, vector<32x16xf32>
    %cst_39 = arith.constant dense<0.000000e+00> : vector<16x16xf32>
    %67 = tpu.matmul %65, %66, %cst_39 {dimension_numbers = #tpu.dot_dimension_numbers<[1], [0], [0], [1], [0, 0, 1, 1], [], []>} : vector<16x32xf32>, vector<32x16xf32>, vector<16x16xf32> -> vector<16x16xf32>
    %c0_40 = arith.constant 0 : index
    %c0_41 = arith.constant 0 : index
    %68 = vector.load %arg13[%c0_40, %c0_41] : memref<1x16xf32, #tpu.memory_space<vmem>>, vector<1x16xf32>
    %69 = vector.broadcast %68 : vector<1x16xf32> to vector<16x16xf32>
    %70 = arith.addf %67, %69 : vector<16x16xf32>
    %cst_42 = arith.constant 0.000000e+00 : f32
    %71 = vector.broadcast %cst_42 : f32 to vector<16x16xf32>
    %72 = arith.maximumf %70, %71 : vector<16x16xf32>
    %cst_43 = arith.constant 0.000000e+00 : f32
    %73 = vector.broadcast %cst_43 : f32 to vector<4x16xf32>
    %74 = tpu.concatenate %73, %72 in 0 : vector<4x16xf32>, vector<16x16xf32> -> vector<20x16xf32>
    %75 = vector.extract_strided_slice %74 {offsets = [0, 0], sizes = [16, 16], strides = [1, 1]} : vector<20x16xf32> to vector<16x16xf32>
    %76 = vector.extract_strided_slice %74 {offsets = [4, 0], sizes = [16, 16], strides = [1, 1]} : vector<20x16xf32> to vector<16x16xf32>
    %77 = tpu.concatenate %75, %76 in 1 : vector<16x16xf32>, vector<16x16xf32> -> vector<16x32xf32>
    %c0_44 = arith.constant 0 : index
    %c0_45 = arith.constant 0 : index
    %78 = vector.load %arg14[%c0_44, %c0_45] : memref<32x16xf32, #tpu.memory_space<vmem>>, vector<32x16xf32>
    %cst_46 = arith.constant dense<0.000000e+00> : vector<16x16xf32>
    %79 = tpu.matmul %77, %78, %cst_46 {dimension_numbers = #tpu.dot_dimension_numbers<[1], [0], [0], [1], [0, 0, 1, 1], [], []>} : vector<16x32xf32>, vector<32x16xf32>, vector<16x16xf32> -> vector<16x16xf32>
    %c0_47 = arith.constant 0 : index
    %c0_48 = arith.constant 0 : index
    %80 = vector.load %arg15[%c0_47, %c0_48] : memref<1x16xf32, #tpu.memory_space<vmem>>, vector<1x16xf32>
    %81 = vector.broadcast %80 : vector<1x16xf32> to vector<16x16xf32>
    %82 = arith.addf %79, %81 : vector<16x16xf32>
    %cst_49 = arith.constant 0.000000e+00 : f32
    %83 = vector.broadcast %cst_49 : f32 to vector<16x16xf32>
    %84 = arith.maximumf %82, %83 : vector<16x16xf32>
    %85 = arith.addf %84, %60 : vector<16x16xf32>
    %cst_50 = arith.constant 0.000000e+00 : f32
    %86 = vector.broadcast %cst_50 : f32 to vector<16x16xf32>
    %87 = arith.maximumf %85, %86 : vector<16x16xf32>
    %88 = vector.extract_strided_slice %87 {offsets = [15, 0], sizes = [1, 16], strides = [1, 1]} : vector<16x16xf32> to vector<1x16xf32>
    %c0_51 = arith.constant 0 : index
    %c0_52 = arith.constant 0 : index
    %89 = vector.load %arg16[%c0_51, %c0_52] : memref<16x8xf32, #tpu.memory_space<vmem>>, vector<16x8xf32>
    %cst_53 = arith.constant dense<0.000000e+00> : vector<1x8xf32>
    %90 = tpu.matmul %88, %89, %cst_53 {dimension_numbers = #tpu.dot_dimension_numbers<[1], [0], [0], [1], [0, 0, 1, 1], [], []>} : vector<1x16xf32>, vector<16x8xf32>, vector<1x8xf32> -> vector<1x8xf32>
    %c0_54 = arith.constant 0 : index
    %c0_55 = arith.constant 0 : index
    %91 = vector.load %arg17[%c0_54, %c0_55] : memref<1x8xf32, #tpu.memory_space<vmem>>, vector<1x8xf32>
    %92 = arith.addf %90, %91 : vector<1x8xf32>
    %cst_56 = arith.constant dense<0xFF800000> : vector<1xf32>
    %93 = vector.multi_reduction <maximumf>, %92, %cst_56 [1] : vector<1x8xf32> to vector<1xf32>
    %94 = vector.shape_cast %93 : vector<1xf32> to vector<1x1xf32>
    %95 = vector.broadcast %94 : vector<1x1xf32> to vector<1x8xf32>
    %96 = arith.subf %92, %95 : vector<1x8xf32>
    %97 = math.exp %96 : vector<1x8xf32>
    %cst_57 = arith.constant dense<0.000000e+00> : vector<1xf32>
    %98 = vector.multi_reduction <add>, %97, %cst_57 [1] : vector<1x8xf32> to vector<1xf32>
    %99 = vector.shape_cast %98 : vector<1xf32> to vector<1x1xf32>
    %100 = math.log %99 : vector<1x1xf32>
    %101 = arith.addf %94, %100 : vector<1x1xf32>
    %102 = vector.broadcast %101 : vector<1x1xf32> to vector<1x8xf32>
    %103 = arith.subf %92, %102 : vector<1x8xf32>
    %c0_58 = arith.constant 0 : index
    %c0_59 = arith.constant 0 : index
    %c0_60 = arith.constant 0 : index
    %104 = vector.load %arg18[%c0_58, %c0_59, %c0_60] : memref<1x1x8xf32, #tpu.memory_space<vmem>>, vector<1x1x8xf32>
    %105 = vector.shape_cast %104 : vector<1x1x8xf32> to vector<1x8xf32>
    %106 = vector.shape_cast %103 : vector<1x8xf32> to vector<1x1x8xf32>
    tpu.vector_store %arg18[%c0_58, %c0_59, %c0_60], %106 {strides = array<i32>} : memref<1x1x8xf32, #tpu.memory_space<vmem>>, vector<1x1x8xf32>,
    return
  }
  func.func @transform_0(%arg0: i32) -> (i32, i32, i32) {
    %c0_i32 = arith.constant 0 : i32
    %c0_i32_0 = arith.constant 0 : i32
    %c0_i32_1 = arith.constant 0 : i32
    return %arg0, %c0_i32, %c0_i32_0 : i32, i32, i32
  }
  func.func @transform_1(%arg0: i32) -> (i32, i32) {
    %c0_i32 = arith.constant 0 : i32
    %c0_i32_0 = arith.constant 0 : i32
    %c0_i32_1 = arith.constant 0 : i32
    return %c0_i32, %c0_i32_0 : i32, i32
  }
  func.func @transform_2(%arg0: i32) -> (i32, i32) {
    %c0_i32 = arith.constant 0 : i32
    %c0_i32_0 = arith.constant 0 : i32
    %c0_i32_1 = arith.constant 0 : i32
    return %c0_i32, %c0_i32_0 : i32, i32
  }
  func.func @transform_3(%arg0: i32) -> (i32, i32) {
    %c0_i32 = arith.constant 0 : i32
    %c0_i32_0 = arith.constant 0 : i32
    %c0_i32_1 = arith.constant 0 : i32
    return %c0_i32, %c0_i32_0 : i32, i32
  }
  func.func @transform_4(%arg0: i32) -> (i32, i32) {
    %c0_i32 = arith.constant 0 : i32
    %c0_i32_0 = arith.constant 0 : i32
    %c0_i32_1 = arith.constant 0 : i32
    return %c0_i32, %c0_i32_0 : i32, i32
  }
  func.func @transform_5(%arg0: i32) -> (i32, i32) {
    %c0_i32 = arith.constant 0 : i32
    %c0_i32_0 = arith.constant 0 : i32
    %c0_i32_1 = arith.constant 0 : i32
    return %c0_i32, %c0_i32_0 : i32, i32
  }
  func.func @transform_6(%arg0: i32) -> (i32, i32) {
    %c0_i32 = arith.constant 0 : i32
    %c0_i32_0 = arith.constant 0 : i32
    %c0_i32_1 = arith.constant 0 : i32
    return %c0_i32, %c0_i32_0 : i32, i32
  }
  func.func @transform_7(%arg0: i32) -> (i32, i32) {
    %c0_i32 = arith.constant 0 : i32
    %c0_i32_0 = arith.constant 0 : i32
    %c0_i32_1 = arith.constant 0 : i32
    return %c0_i32, %c0_i32_0 : i32, i32
  }
  func.func @transform_8(%arg0: i32) -> (i32, i32) {
    %c0_i32 = arith.constant 0 : i32
    %c0_i32_0 = arith.constant 0 : i32
    %c0_i32_1 = arith.constant 0 : i32
    return %c0_i32, %c0_i32_0 : i32, i32
  }
  func.func @transform_9(%arg0: i32) -> (i32, i32) {
    %c0_i32 = arith.constant 0 : i32
    %c0_i32_0 = arith.constant 0 : i32
    %c0_i32_1 = arith.constant 0 : i32
    return %c0_i32, %c0_i32_0 : i32, i32
  }
  func.func @transform_10(%arg0: i32) -> (i32, i32) {
    %c0_i32 = arith.constant 0 : i32
    %c0_i32_0 = arith.constant 0 : i32
    %c0_i32_1 = arith.constant 0 : i32
    return %c0_i32, %c0_i32_0 : i32, i32
  }
  func.func @transform_11(%arg0: i32) -> (i32, i32) {
    %c0_i32 = arith.constant 0 : i32
    %c0_i32_0 = arith.constant 0 : i32
    %c0_i32_1 = arith.constant 0 : i32
    return %c0_i32, %c0_i32_0 : i32, i32
  }
  func.func @transform_12(%arg0: i32) -> (i32, i32) {
    %c0_i32 = arith.constant 0 : i32
    %c0_i32_0 = arith.constant 0 : i32
    %c0_i32_1 = arith.constant 0 : i32
    return %c0_i32, %c0_i32_0 : i32, i32
  }
  func.func @transform_13(%arg0: i32) -> (i32, i32) {
    %c0_i32 = arith.constant 0 : i32
    %c0_i32_0 = arith.constant 0 : i32
    %c0_i32_1 = arith.constant 0 : i32
    return %c0_i32, %c0_i32_0 : i32, i32
  }
  func.func @transform_14(%arg0: i32) -> (i32, i32) {
    %c0_i32 = arith.constant 0 : i32
    %c0_i32_0 = arith.constant 0 : i32
    %c0_i32_1 = arith.constant 0 : i32
    return %c0_i32, %c0_i32_0 : i32, i32
  }
  func.func @transform_15(%arg0: i32) -> (i32, i32) {
    %c0_i32 = arith.constant 0 : i32
    %c0_i32_0 = arith.constant 0 : i32
    %c0_i32_1 = arith.constant 0 : i32
    return %c0_i32, %c0_i32_0 : i32, i32
  }
  func.func @transform_16(%arg0: i32) -> (i32, i32) {
    %c0_i32 = arith.constant 0 : i32
    %c0_i32_0 = arith.constant 0 : i32
    %c0_i32_1 = arith.constant 0 : i32
    return %c0_i32, %c0_i32_0 : i32, i32
  }
  func.func @transform_17(%arg0: i32) -> (i32, i32, i32) {
    %c0_i32 = arith.constant 0 : i32
    %c0_i32_0 = arith.constant 0 : i32
    %c0_i32_1 = arith.constant 0 : i32
    return %arg0, %c0_i32, %c0_i32_0 : i32, i32, i32
  }
}

</mosaic_0001>

<llo_original>
// kernel: tpu_custom_call.1
$region0: #{tpu_custom_call.1}
  #allocation0 [shape = 'u32[]', space=smem, size = 0x4, offset = 0x4, fixed_abs, tag = 'smem constant byte address 0x4 - core index']
  #allocation1 [shape = 'u32[72,128]{1,0:T(1,128)}', space=vmem, size = 0x9000, scoped, tag = 'internal scratch']
  %s0 = inlined_call_operand.vmem [shape: f32[2,16,4], index: 0, kind: input, shape index: {}]
  %s1 = inlined_call_operand.vmem [shape: f32[8,16], index: 1, kind: input, shape index: {}]
  %s2 = inlined_call_operand.vmem [shape: f32[1,16], index: 2, kind: input, shape index: {}]
  %s3 = inlined_call_operand.vmem [shape: f32[32,16], index: 3, kind: input, shape index: {}]
  %s4 = inlined_call_operand.vmem [shape: f32[1,16], index: 4, kind: input, shape index: {}]
  %s5 = inlined_call_operand.vmem [shape: f32[4,16], index: 5, kind: input, shape index: {}]
  %s6 = inlined_call_operand.vmem [shape: f32[1,16], index: 6, kind: input, shape index: {}]
  %s7 = inlined_call_operand.vmem [shape: f32[32,16], index: 7, kind: input, shape index: {}]
  %s8 = inlined_call_operand.vmem [shape: f32[1,16], index: 8, kind: input, shape index: {}]
  %s9 = inlined_call_operand.vmem [shape: f32[32,16], index: 9, kind: input, shape index: {}]
  %s10 = inlined_call_operand.vmem [shape: f32[1,16], index: 10, kind: input, shape index: {}]
  %s11 = inlined_call_operand.vmem [shape: f32[32,16], index: 11, kind: input, shape index: {}]
  %s12 = inlined_call_operand.vmem [shape: f32[1,16], index: 12, kind: input, shape index: {}]
  %s13 = inlined_call_operand.vmem [shape: f32[32,16], index: 13, kind: input, shape index: {}]
  %s14 = inlined_call_operand.vmem [shape: f32[1,16], index: 14, kind: input, shape index: {}]
  %s15 = inlined_call_operand.vmem [shape: f32[16,8], index: 15, kind: input, shape index: {}]
  %s16 = inlined_call_operand.vmem [shape: f32[1,8], index: 16, kind: input, shape index: {}]
  %s17 = inlined_call_operand.hbm [shape: f32[2,1,8], index: 17, kind: output, shape index: {}]
  %s18 = sld [smem:[#allocation0]]
  $region101: #{tpu_custom_call.1} parent=0
    _
  %s20 = ssub.s32 1, %s18
  %s21 = scalar_select 0, %s20, %s18
  $region1: #{tpu_custom_call.1} parent=0
    #allocation2 [shape = 'u8[1024]{0}', space=vmem, size = 0x400, scoped, tag = 'output window, operand 0']
    #allocation3 [shape = 's32[2]{0}', space=sflag, size = 0x8, scoped, tag = 'scoped memory for tpu_custom_call.1']
    %22 = vsyncpa [#allocation3], 0
    %s23 = scalar_lea.sflag [#allocation3], 1
    %24 = vsyncpa %s23, 0
    loop: start=0, step=1, limit=4
    $region2: #{tpu_custom_call.1} parent=1 // loop_pre_header
      _
    $region3: #{tpu_custom_call.1} parent=1 // loop_header
      %s26 = sphi 0, %s30
      %p27 = scmp.ge.s32.totalorder %s26, 4
      %s36 = sphi 0, %s38
      %s39 = sphi 0, %s36
      %s40 = sphi 0, %s39
      %s56 = sphi 0, %s40
      %s60 = sphi 0, %s60
      %s62 = sphi 0, %s60
      %s63 = sphi 0, %s62
      %s77 = sphi 0, %s63
      %s81 = sphi 0, %s81
      %s83 = sphi 0, %s81
      %s84 = sphi 0, %s83
      %s98 = sphi 0, %s84
      %s102 = sphi 0, %s102
      %s104 = sphi 0, %s102
      %s105 = sphi 0, %s104
      %s119 = sphi 0, %s105
      %s123 = sphi 0, %s123
      %s125 = sphi 0, %s123
      %s126 = sphi 0, %s125
      %s140 = sphi 0, %s126
      %s144 = sphi 0, %s144
      %s146 = sphi 0, %s144
      %s147 = sphi 0, %s146
      %s161 = sphi 0, %s147
      %s165 = sphi 0, %s165
      %s167 = sphi 0, %s165
      %s168 = sphi 0, %s167
      %s182 = sphi 0, %s168
      %s186 = sphi 0, %s186
      %s188 = sphi 0, %s186
      %s189 = sphi 0, %s188
      %s203 = sphi 0, %s189
      %s207 = sphi 0, %s207
      %s209 = sphi 0, %s207
      %s210 = sphi 0, %s209
      %s224 = sphi 0, %s210
      %s228 = sphi 0, %s228
      %s230 = sphi 0, %s228
      %s231 = sphi 0, %s230
      %s245 = sphi 0, %s231
      %s249 = sphi 0, %s249
      %s251 = sphi 0, %s249
      %s252 = sphi 0, %s251
      %s266 = sphi 0, %s252
      %s270 = sphi 0, %s270
      %s272 = sphi 0, %s270
      %s273 = sphi 0, %s272
      %s287 = sphi 0, %s273
      %s291 = sphi 0, %s291
      %s293 = sphi 0, %s291
      %s294 = sphi 0, %s293
      %s308 = sphi 0, %s294
      %s312 = sphi 0, %s312
      %s314 = sphi 0, %s312
      %s315 = sphi 0, %s314
      %s329 = sphi 0, %s315
      %s333 = sphi 0, %s333
      %s335 = sphi 0, %s333
      %s336 = sphi 0, %s335
      %s350 = sphi 0, %s336
      %s354 = sphi 0, %s354
      %s356 = sphi 0, %s354
      %s357 = sphi 0, %s356
      %s371 = sphi 0, %s357
      %s375 = sphi 0, %s375
      %s377 = sphi 0, %s375
      %s378 = sphi 0, %s377
      %s392 = sphi 0, %s378
      %s398 = sphi 0, %s400
      %s401 = sphi 0, %s398
      %s402 = sphi 0, %s401
      %s418 = sphi 0, %s402
    $region4: #{tpu_custom_call.1} parent=1 // loop_header_branch
      %29 = sbr.rel (%p27) target = $region8
    $region5: #{tpu_custom_call.1} parent=1 // loop_body
      %s31 = ssub.s32 %s26, 1
      %s32 = ssub.s32 %s26, 2
      %s33 = sadd.s32 %s26, 1
      %s34 = ssub.s32 %s26, %s33
      %p35 = scmp.eq.s32.totalorder %s34, 0
      %s37 = sadd.s32 %s36, 1
      %s38 = scalar_select %p35, %s36, %s37
      %p41 = pneg %p35
      %p42 = scmp.eq.s32.totalorder %s26, 1
      %p43 = por %p41, %p42
      %p44 = scmp.ne.s32.totalorder %s36, %s39
      %p45 = scmp.eq.s32.totalorder %s26, 0
      %p46 = por %p44, %p45
      %p47 = scmp.ne.s32.totalorder %s36, %s39
      %p48 = scmp.eq.s32.totalorder %s31, 1
      %p49 = por %p47, %p48
      %p50 = scmp.ne.s32.totalorder %s39, %s40
      %p51 = scmp.eq.s32.totalorder %s31, 0
      %p52 = por %p50, %p51
      %p53 = scmp.ne.s32.totalorder %s39, %s40
      %p54 = scmp.eq.s32.totalorder %s32, 1
      %p55 = por %p53, %p54
      %p57 = scmp.ne.s32.totalorder %s40, %s56
      %p58 = scmp.eq.s32.totalorder %s32, 0
      %p59 = por %p57, %p58
      %s61 = sadd.s32 %s60, 1
      %p64 = scmp.eq.s32.totalorder %s26, 1
      %p65 = scmp.ne.s32.totalorder %s60, %s62
      %p66 = scmp.eq.s32.totalorder %s26, 0
      %p67 = por %p65, %p66
      %p68 = scmp.ne.s32.totalorder %s60, %s62
      %p69 = scmp.eq.s32.totalorder %s31, 1
      %p70 = por %p68, %p69
      %p71 = scmp.ne.s32.totalorder %s62, %s63
      %p72 = scmp.eq.s32.totalorder %s31, 0
      %p73 = por %p71, %p72
      %p74 = scmp.ne.s32.totalorder %s62, %s63
      %p75 = scmp.eq.s32.totalorder %s32, 1
      %p76 = por %p74, %p75
      %p78 = scmp.ne.s32.totalorder %s63, %s77
      %p79 = scmp.eq.s32.totalorder %s32, 0
      %p80 = por %p78, %p79
      %s82 = sadd.s32 %s81, 1
      %p85 = scmp.eq.s32.totalorder %s26, 1
      %p86 = scmp.ne.s32.totalorder %s81, %s83
      %p87 = scmp.eq.s32.totalorder %s26, 0
      %p88 = por %p86, %p87
      %p89 = scmp.ne.s32.totalorder %s81, %s83
      %p90 = scmp.eq.s32.totalorder %s31, 1
      %p91 = por %p89, %p90
      %p92 = scmp.ne.s32.totalorder %s83, %s84
      %p93 = scmp.eq.s32.totalorder %s31, 0
      %p94 = por %p92, %p93
      %p95 = scmp.ne.s32.totalorder %s83, %s84
      %p96 = scmp.eq.s32.totalorder %s32, 1
      %p97 = por %p95, %p96
      %p99 = scmp.ne.s32.totalorder %s84, %s98
      %p100 = scmp.eq.s32.totalorder %s32, 0
      %p101 = por %p99, %p100
      %s103 = sadd.s32 %s102, 1
      %p106 = scmp.eq.s32.totalorder %s26, 1
      %p107 = scmp.ne.s32.totalorder %s102, %s104
      %p108 = scmp.eq.s32.totalorder %s26, 0
      %p109 = por %p107, %p108
      %p110 = scmp.ne.s32.totalorder %s102, %s104
      %p111 = scmp.eq.s32.totalorder %s31, 1
      %p112 = por %p110, %p111
      %p113 = scmp.ne.s32.totalorder %s104, %s105
      %p114 = scmp.eq.s32.totalorder %s31, 0
      %p115 = por %p113, %p114
      %p116 = scmp.ne.s32.totalorder %s104, %s105
      %p117 = scmp.eq.s32.totalorder %s32, 1
      %p118 = por %p116, %p117
      %p120 = scmp.ne.s32.totalorder %s105, %s119
      %p121 = scmp.eq.s32.totalorder %s32, 0
      %p122 = por %p120, %p121
      %s124 = sadd.s32 %s123, 1
      %p127 = scmp.eq.s32.totalorder %s26, 1
      %p128 = scmp.ne.s32.totalorder %s123, %s125
      %p129 = scmp.eq.s32.totalorder %s26, 0
      %p130 = por %p128, %p129
      %p131 = scmp.ne.s32.totalorder %s123, %s125
      %p132 = scmp.eq.s32.totalorder %s31, 1
      %p133 = por %p131, %p132
      %p134 = scmp.ne.s32.totalorder %s125, %s126
      %p135 = scmp.eq.s32.totalorder %s31, 0
      %p136 = por %p134, %p135
      %p137 = scmp.ne.s32.totalorder %s125, %s126
      %p138 = scmp.eq.s32.totalorder %s32, 1
      %p139 = por %p137, %p138
      %p141 = scmp.ne.s32.totalorder %s126, %s140
      %p142 = scmp.eq.s32.totalorder %s32, 0
      %p143 = por %p141, %p142
      %s145 = sadd.s32 %s144, 1
      %p148 = scmp.eq.s32.totalorder %s26, 1
      %p149 = scmp.ne.s32.totalorder %s144, %s146
      %p150 = scmp.eq.s32.totalorder %s26, 0
      %p151 = por %p149, %p150
      %p152 = scmp.ne.s32.totalorder %s144, %s146
      %p153 = scmp.eq.s32.totalorder %s31, 1
      %p154 = por %p152, %p153
      %p155 = scmp.ne.s32.totalorder %s146, %s147
      %p156 = scmp.eq.s32.totalorder %s31, 0
      %p157 = por %p155, %p156
      %p158 = scmp.ne.s32.totalorder %s146, %s147
      %p159 = scmp.eq.s32.totalorder %s32, 1
      %p160 = por %p158, %p159
      %p162 = scmp.ne.s32.totalorder %s147, %s161
      %p163 = scmp.eq.s32.totalorder %s32, 0
      %p164 = por %p162, %p163
      %s166 = sadd.s32 %s165, 1
      %p169 = scmp.eq.s32.totalorder %s26, 1
      %p170 = scmp.ne.s32.totalorder %s165, %s167
      %p171 = scmp.eq.s32.totalorder %s26, 0
      %p172 = por %p170, %p171
      %p173 = scmp.ne.s32.totalorder %s165, %s167
      %p174 = scmp.eq.s32.totalorder %s31, 1
      %p175 = por %p173, %p174
      %p176 = scmp.ne.s32.totalorder %s167, %s168
      %p177 = scmp.eq.s32.totalorder %s31, 0
      %p178 = por %p176, %p177
      %p179 = scmp.ne.s32.totalorder %s167, %s168
      %p180 = scmp.eq.s32.totalorder %s32, 1
      %p181 = por %p179, %p180
      %p183 = scmp.ne.s32.totalorder %s168, %s182
      %p184 = scmp.eq.s32.totalorder %s32, 0
      %p185 = por %p183, %p184
      %s187 = sadd.s32 %s186, 1
      %p190 = scmp.eq.s32.totalorder %s26, 1
      %p191 = scmp.ne.s32.totalorder %s186, %s188
      %p192 = scmp.eq.s32.totalorder %s26, 0
      %p193 = por %p191, %p192
      %p194 = scmp.ne.s32.totalorder %s186, %s188
      %p195 = scmp.eq.s32.totalorder %s31, 1
      %p196 = por %p194, %p195
      %p197 = scmp.ne.s32.totalorder %s188, %s189
      %p198 = scmp.eq.s32.totalorder %s31, 0
      %p199 = por %p197, %p198
      %p200 = scmp.ne.s32.totalorder %s188, %s189
      %p201 = scmp.eq.s32.totalorder %s32, 1
      %p202 = por %p200, %p201
      %p204 = scmp.ne.s32.totalorder %s189, %s203
      %p205 = scmp.eq.s32.totalorder %s32, 0
      %p206 = por %p204, %p205
      %s208 = sadd.s32 %s207, 1
      %p211 = scmp.eq.s32.totalorder %s26, 1
      %p212 = scmp.ne.s32.totalorder %s207, %s209
      %p213 = scmp.eq.s32.totalorder %s26, 0
      %p214 = por %p212, %p213
      %p215 = scmp.ne.s32.totalorder %s207, %s209
      %p216 = scmp.eq.s32.totalorder %s31, 1
      %p217 = por %p215, %p216
      %p218 = scmp.ne.s32.totalorder %s209, %s210
      %p219 = scmp.eq.s32.totalorder %s31, 0
      %p220 = por %p218, %p219
      %p221 = scmp.ne.s32.totalorder %s209, %s210
      %p222 = scmp.eq.s32.totalorder %s32, 1
      %p223 = por %p221, %p222
      %p225 = scmp.ne.s32.totalorder %s210, %s224
      %p226 = scmp.eq.s32.totalorder %s32, 0
      %p227 = por %p225, %p226
      %s229 = sadd.s32 %s228, 1
      %p232 = scmp.eq.s32.totalorder %s26, 1
      %p233 = scmp.ne.s32.totalorder %s228, %s230
      %p234 = scmp.eq.s32.totalorder %s26, 0
      %p235 = por %p233, %p234
      %p236 = scmp.ne.s32.totalorder %s228, %s230
      %p237 = scmp.eq.s32.totalorder %s31, 1
      %p238 = por %p236, %p237
      %p239 = scmp.ne.s32.totalorder %s230, %s231
      %p240 = scmp.eq.s32.totalorder %s31, 0
      %p241 = por %p239, %p240
      %p242 = scmp.ne.s32.totalorder %s230, %s231
      %p243 = scmp.eq.s32.totalorder %s32, 1
      %p244 = por %p242, %p243
      %p246 = scmp.ne.s32.totalorder %s231, %s245
      %p247 = scmp.eq.s32.totalorder %s32, 0
      %p248 = por %p246, %p247
      %s250 = sadd.s32 %s249, 1
      %p253 = scmp.eq.s32.totalorder %s26, 1
      %p254 = scmp.ne.s32.totalorder %s249, %s251
      %p255 = scmp.eq.s32.totalorder %s26, 0
      %p256 = por %p254, %p255
      %p257 = scmp.ne.s32.totalorder %s249, %s251
      %p258 = scmp.eq.s32.totalorder %s31, 1
      %p259 = por %p257, %p258
      %p260 = scmp.ne.s32.totalorder %s251, %s252
      %p261 = scmp.eq.s32.totalorder %s31, 0
      %p262 = por %p260, %p261
      %p263 = scmp.ne.s32.totalorder %s251, %s252
      %p264 = scmp.eq.s32.totalorder %s32, 1
      %p265 = por %p263, %p264
      %p267 = scmp.ne.s32.totalorder %s252, %s266
      %p268 = scmp.eq.s32.totalorder %s32, 0
      %p269 = por %p267, %p268
      %s271 = sadd.s32 %s270, 1
      %p274 = scmp.eq.s32.totalorder %s26, 1
      %p275 = scmp.ne.s32.totalorder %s270, %s272
      %p276 = scmp.eq.s32.totalorder %s26, 0
      %p277 = por %p275, %p276
      %p278 = scmp.ne.s32.totalorder %s270, %s272
      %p279 = scmp.eq.s32.totalorder %s31, 1
      %p280 = por %p278, %p279
      %p281 = scmp.ne.s32.totalorder %s272, %s273
      %p282 = scmp.eq.s32.totalorder %s31, 0
      %p283 = por %p281, %p282
      %p284 = scmp.ne.s32.totalorder %s272, %s273
      %p285 = scmp.eq.s32.totalorder %s32, 1
      %p286 = por %p284, %p285
      %p288 = scmp.ne.s32.totalorder %s273, %s287
      %p289 = scmp.eq.s32.totalorder %s32, 0
      %p290 = por %p288, %p289
      %s292 = sadd.s32 %s291, 1
      %p295 = scmp.eq.s32.totalorder %s26, 1
      %p296 = scmp.ne.s32.totalorder %s291, %s293
      %p297 = scmp.eq.s32.totalorder %s26, 0
      %p298 = por %p296, %p297
      %p299 = scmp.ne.s32.totalorder %s291, %s293
      %p300 = scmp.eq.s32.totalorder %s31, 1
      %p301 = por %p299, %p300
      %p302 = scmp.ne.s32.totalorder %s293, %s294
      %p303 = scmp.eq.s32.totalorder %s31, 0
      %p304 = por %p302, %p303
      %p305 = scmp.ne.s32.totalorder %s293, %s294
      %p306 = scmp.eq.s32.totalorder %s32, 1
      %p307 = por %p305, %p306
      %p309 = scmp.ne.s32.totalorder %s294, %s308
      %p310 = scmp.eq.s32.totalorder %s32, 0
      %p311 = por %p309, %p310
      %s313 = sadd.s32 %s312, 1
      %p316 = scmp.eq.s32.totalorder %s26, 1
      %p317 = scmp.ne.s32.totalorder %s312, %s314
      %p318 = scmp.eq.s32.totalorder %s26, 0
      %p319 = por %p317, %p318
      %p320 = scmp.ne.s32.totalorder %s312, %s314
      %p321 = scmp.eq.s32.totalorder %s31, 1
      %p322 = por %p320, %p321
      %p323 = scmp.ne.s32.totalorder %s314, %s315
      %p324 = scmp.eq.s32.totalorder %s31, 0
      %p325 = por %p323, %p324
      %p326 = scmp.ne.s32.totalorder %s314, %s315
      %p327 = scmp.eq.s32.totalorder %s32, 1
      %p328 = por %p326, %p327
      %p330 = scmp.ne.s32.totalorder %s315, %s329
      %p331 = scmp.eq.s32.totalorder %s32, 0
      %p332 = por %p330, %p331
      %s334 = sadd.s32 %s333, 1
      %p337 = scmp.eq.s32.totalorder %s26, 1
      %p338 = scmp.ne.s32.totalorder %s333, %s335
      %p339 = scmp.eq.s32.totalorder %s26, 0
      %p340 = por %p338, %p339
      %p341 = scmp.ne.s32.totalorder %s333, %s335
      %p342 = scmp.eq.s32.totalorder %s31, 1
      %p343 = por %p341, %p342
      %p344 = scmp.ne.s32.totalorder %s335, %s336
      %p345 = scmp.eq.s32.totalorder %s31, 0
      %p346 = por %p344, %p345
      %p347 = scmp.ne.s32.totalorder %s335, %s336
      %p348 = scmp.eq.s32.totalorder %s32, 1
      %p349 = por %p347, %p348
      %p351 = scmp.ne.s32.totalorder %s336, %s350
      %p352 = scmp.eq.s32.totalorder %s32, 0
      %p353 = por %p351, %p352
      %s355 = sadd.s32 %s354, 1
      %p358 = scmp.eq.s32.totalorder %s26, 1
      %p359 = scmp.ne.s32.totalorder %s354, %s356
      %p360 = scmp.eq.s32.totalorder %s26, 0
      %p361 = por %p359, %p360
      %p362 = scmp.ne.s32.totalorder %s354, %s356
      %p363 = scmp.eq.s32.totalorder %s31, 1
      %p364 = por %p362, %p363
      %p365 = scmp.ne.s32.totalorder %s356, %s357
      %p366 = scmp.eq.s32.totalorder %s31, 0
      %p367 = por %p365, %p366
      %p368 = scmp.ne.s32.totalorder %s356, %s357
      %p369 = scmp.eq.s32.totalorder %s32, 1
      %p370 = por %p368, %p369
      %p372 = scmp.ne.s32.totalorder %s357, %s371
      %p373 = scmp.eq.s32.totalorder %s32, 0
      %p374 = por %p372, %p373
      %s376 = sadd.s32 %s375, 1
      %p379 = scmp.eq.s32.totalorder %s26, 1
      %p380 = scmp.ne.s32.totalorder %s375, %s377
      %p381 = scmp.eq.s32.totalorder %s26, 0
      %p382 = por %p380, %p381
      %p383 = scmp.ne.s32.totalorder %s375, %s377
      %p384 = scmp.eq.s32.totalorder %s31, 1
      %p385 = por %p383, %p384
      %p386 = scmp.ne.s32.totalorder %s377, %s378
      %p387 = scmp.eq.s32.totalorder %s31, 0
      %p388 = por %p386, %p387
      %p389 = scmp.ne.s32.totalorder %s377, %s378
      %p390 = scmp.eq.s32.totalorder %s32, 1
      %p391 = por %p389, %p390
      %p393 = scmp.ne.s32.totalorder %s378, %s392
      %p394 = scmp.eq.s32.totalorder %s32, 0
      %p395 = por %p393, %p394
      %s396 = ssub.s32 %s26, %s33
      %p397 = scmp.eq.s32.totalorder %s396, 0
      %s399 = sadd.s32 %s398, 1
      %s400 = scalar_select %p397, %s398, %s399
      %p403 = pneg %p397
      %p404 = scmp.eq.s32.totalorder %s26, 1
      %p405 = por %p403, %p404
      %p406 = scmp.ne.s32.totalorder %s398, %s401
      %p407 = scmp.eq.s32.totalorder %s26, 0
      %p408 = por %p406, %p407
      %p409 = scmp.ne.s32.totalorder %s398, %s401
      %p410 = scmp.eq.s32.totalorder %s31, 1
      %p411 = por %p409, %p410
      %p412 = scmp.ne.s32.totalorder %s401, %s402
      %p413 = scmp.eq.s32.totalorder %s31, 0
      %p414 = por %p412, %p413
      %p415 = scmp.ne.s32.totalorder %s401, %s402
      %p416 = scmp.eq.s32.totalorder %s32, 1
      %p417 = por %p415, %p416
      %p419 = scmp.ne.s32.totalorder %s402, %s418
      %p420 = scmp.eq.s32.totalorder %s32, 0
      %p421 = por %p419, %p420
      %p422 = scmp.le.s32.totalorder 1, %s26
      %p423 = scmp.lt.s32.totalorder %s26, 3
      %p424 = pnand %p422, %p423
      %p425 = pneg %p424
      // Predicated region
      $region9: #{tpu_custom_call.1} parent=5 // pred_check
        _
      $region10: #{tpu_custom_call.1} parent=5 // pred_check_branch
        %427 = sbr.rel (%p424) target = $region12
      $region11: #{tpu_custom_call.1} parent=5 // pred_region
        %s428 = ssub.s32 %s26, 1
        // Predicated region
        $region13: #{tpu_custom_call.1} parent=11 // pred_check
          %p429 = pneg %p73
        $region14: #{tpu_custom_call.1} parent=11 // pred_check_branch
          %431 = sbr.rel (%p429) target = $region16
        $region15: #{tpu_custom_call.1} parent=11 // pred_region
          _
        $region16: #{tpu_custom_call.1} parent=11 // pred_fallthru
          _
        // Predicated region
        $region17: #{tpu_custom_call.1} parent=11 // pred_check
          %p432 = pneg %p94
        $region18: #{tpu_custom_call.1} parent=11 // pred_check_branch
          %434 = sbr.rel (%p432) target = $region20
        $region19: #{tpu_custom_call.1} parent=11 // pred_region
          _
        $region20: #{tpu_custom_call.1} parent=11 // pred_fallthru
          _
        // Predicated region
        $region21: #{tpu_custom_call.1} parent=11 // pred_check
          %p435 = pneg %p115
        $region22: #{tpu_custom_call.1} parent=11 // pred_check_branch
          %437 = sbr.rel (%p435) target = $region24
        $region23: #{tpu_custom_call.1} parent=11 // pred_region
          _
        $region24: #{tpu_custom_call.1} parent=11 // pred_fallthru
          _
        // Predicated region
        $region25: #{tpu_custom_call.1} parent=11 // pred_check
          %p438 = pneg %p136
        $region26: #{tpu_custom_call.1} parent=11 // pred_check_branch
          %440 = sbr.rel (%p438) target = $region28
        $region27: #{tpu_custom_call.1} parent=11 // pred_region
          _
        $region28: #{tpu_custom_call.1} parent=11 // pred_fallthru
          _
        // Predicated region
        $region29: #{tpu_custom_call.1} parent=11 // pred_check
          %p441 = pneg %p157
        $region30: #{tpu_custom_call.1} parent=11 // pred_check_branch
          %443 = sbr.rel (%p441) target = $region32
        $region31: #{tpu_custom_call.1} parent=11 // pred_region
          _
        $region32: #{tpu_custom_call.1} parent=11 // pred_fallthru
          _
        // Predicated region
        $region33: #{tpu_custom_call.1} parent=11 // pred_check
          %p444 = pneg %p178
        $region34: #{tpu_custom_call.1} parent=11 // pred_check_branch
          %446 = sbr.rel (%p444) target = $region36
        $region35: #{tpu_custom_call.1} parent=11 // pred_region
          _
        $region36: #{tpu_custom_call.1} parent=11 // pred_fallthru
          _
        // Predicated region
        $region37: #{tpu_custom_call.1} parent=11 // pred_check
          %p447 = pneg %p199
        $region38: #{tpu_custom_call.1} parent=11 // pred_check_branch
          %449 = sbr.rel (%p447) target = $region40
        $region39: #{tpu_custom_call.1} parent=11 // pred_region
          _
        $region40: #{tpu_custom_call.1} parent=11 // pred_fallthru
          _
        // Predicated region
        $region41: #{tpu_custom_call.1} parent=11 // pred_check
          %p450 = pneg %p220
        $region42: #{tpu_custom_call.1} parent=11 // pred_check_branch
          %452 = sbr.rel (%p450) target = $region44
        $region43: #{tpu_custom_call.1} parent=11 // pred_region
          _
        $region44: #{tpu_custom_call.1} parent=11 // pred_fallthru
          _
        // Predicated region
        $region45: #{tpu_custom_call.1} parent=11 // pred_check
          %p453 = pneg %p241
        $region46: #{tpu_custom_call.1} parent=11 // pred_check_branch
          %455 = sbr.rel (%p453) target = $region48
        $region47: #{tpu_custom_call.1} parent=11 // pred_region
          _
        $region48: #{tpu_custom_call.1} parent=11 // pred_fallthru
          _
        // Predicated region
        $region49: #{tpu_custom_call.1} parent=11 // pred_check
          %p456 = pneg %p262
        $region50: #{tpu_custom_call.1} parent=11 // pred_check_branch
          %458 = sbr.rel (%p456) target = $region52
        $region51: #{tpu_custom_call.1} parent=11 // pred_region
          _
        $region52: #{tpu_custom_call.1} parent=11 // pred_fallthru
          _
        // Predicated region
        $region53: #{tpu_custom_call.1} parent=11 // pred_check
          %p459 = pneg %p283
        $region54: #{tpu_custom_call.1} parent=11 // pred_check_branch
          %461 = sbr.rel (%p459) target = $region56
        $region55: #{tpu_custom_call.1} parent=11 // pred_region
          _
        $region56: #{tpu_custom_call.1} parent=11 // pred_fallthru
          _
        // Predicated region
        $region57: #{tpu_custom_call.1} parent=11 // pred_check
          %p462 = pneg %p304
        $region58: #{tpu_custom_call.1} parent=11 // pred_check_branch
          %464 = sbr.rel (%p462) target = $region60
        $region59: #{tpu_custom_call.1} parent=11 // pred_region
          _
        $region60: #{tpu_custom_call.1} parent=11 // pred_fallthru
          _
        // Predicated region
        $region61: #{tpu_custom_call.1} parent=11 // pred_check
          %p465 = pneg %p325
        $region62: #{tpu_custom_call.1} parent=11 // pred_check_branch
          %467 = sbr.rel (%p465) target = $region64
        $region63: #{tpu_custom_call.1} parent=11 // pred_region
          _
        $region64: #{tpu_custom_call.1} parent=11 // pred_fallthru
          _
        // Predicated region
        $region65: #{tpu_custom_call.1} parent=11 // pred_check
          %p468 = pneg %p346
        $region66: #{tpu_custom_call.1} parent=11 // pred_check_branch
          %470 = sbr.rel (%p468) target = $region68
        $region67: #{tpu_custom_call.1} parent=11 // pred_region
          _
        $region68: #{tpu_custom_call.1} parent=11 // pred_fallthru
          _
        // Predicated region
        $region69: #{tpu_custom_call.1} parent=11 // pred_check
          %p471 = pneg %p367
        $region70: #{tpu_custom_call.1} parent=11 // pred_check_branch
          %473 = sbr.rel (%p471) target = $region72
        $region71: #{tpu_custom_call.1} parent=11 // pred_region
          _
        $region72: #{tpu_custom_call.1} parent=11 // pred_fallthru
          _
        // Predicated region
        $region73: #{tpu_custom_call.1} parent=11 // pred_check
          %p474 = pneg %p388
        $region74: #{tpu_custom_call.1} parent=11 // pred_check_branch
          %476 = sbr.rel (%p474) target = $region76
        $region75: #{tpu_custom_call.1} parent=11 // pred_region
          _
        $region76: #{tpu_custom_call.1} parent=11 // pred_fallthru
          _
      $region12: #{tpu_custom_call.1} parent=5 // pred_fallthru
        _
      %p477 = scmp.lt.s32.totalorder %s26, 2
      // Predicated region
      $region77: #{tpu_custom_call.1} parent=5 // pred_check
        %p478 = pneg %p477
      $region78: #{tpu_custom_call.1} parent=5 // pred_check_branch
        %480 = sbr.rel (%p478) target = $region80
      $region79: #{tpu_custom_call.1} parent=5 // pred_region
        // Predicated region
        $region81: #{tpu_custom_call.1} parent=79 // pred_check
          %p481 = pneg %p46
        $region82: #{tpu_custom_call.1} parent=79 // pred_check_branch
          %483 = sbr.rel (%p481) target = $region84
        $region83: #{tpu_custom_call.1} parent=79 // pred_region
          %p484 = scmp.lt.s32.totalorder %s26, 1
          %s485 = scalar_select %p484, %s26, 1
          %s486 = smul.addr %s485, 2
          %s487 = smul.addr %s486, 8
          %s488 = scalar_lea.vmem %s0, %s487
        $region84: #{tpu_custom_call.1} parent=79 // pred_fallthru
          _
      $region80: #{tpu_custom_call.1} parent=5 // pred_fallthru
        _
      %p489 = scmp.le.s32.totalorder 1, %s26
      %p490 = scmp.lt.s32.totalorder %s26, 3
      %p491 = pnand %p489, %p490
      %p492 = pneg %p491
      // Predicated region
      $region85: #{tpu_custom_call.1} parent=5 // pred_check
        _
      $region86: #{tpu_custom_call.1} parent=5 // pred_check_branch
        %494 = sbr.rel (%p491) target = $region88
      $region87: #{tpu_custom_call.1} parent=5 // pred_region
        %s495 = ssub.s32 %s26, 1
        %p496 = scmp.lt.s32.totalorder %s31, 1
        %s497 = scalar_select %p496, %s31, 1
        %s498 = smul.addr %s497, 2
        %s499 = smul.addr %s498, 8
        %s500 = scalar_lea.vmem %s0, %s499
        %p501 = pneg %p52
        %p502 = pneg %p49
        %p503 = pneg %p73
        %p504 = pneg %p70
        %p505 = pneg %p94
        %p506 = pneg %p91
        %p507 = pneg %p115
        %p508 = pneg %p112
        %p509 = pneg %p136
        %p510 = pneg %p133
        %p511 = pneg %p157
        %p512 = pneg %p154
        %p513 = pneg %p178
        %p514 = pneg %p175
        %p515 = pneg %p199
        %p516 = pneg %p196
        %p517 = pneg %p220
        %p518 = pneg %p217
        %p519 = pneg %p241
        %p520 = pneg %p238
        %p521 = pneg %p262
        %p522 = pneg %p259
        %p523 = pneg %p283
        %p524 = pneg %p280
        %p525 = pneg %p304
        %p526 = pneg %p301
        %p527 = pneg %p325
        %p528 = pneg %p322
        %p529 = pneg %p346
        %p530 = pneg %p343
        %p531 = pneg %p367
        %p532 = pneg %p364
        %p533 = pneg %p388
        %p534 = pneg %p385
        %p535 = pneg %p414
        %p536 = pneg %p411
        %s537 = sand.u32 %s401, 1
        %s538 = scalar_lea.sflag [#allocation3], %s537
        %s539 = sand.u32 %s401, 1
        %s540 = scalar_lea.vmem [#allocation2], %s539
        %p541 = scmp.lt.s32.totalorder %s31, 1
        %s542 = scalar_select %p541, %s31, 1
        %s543 = smul.addr %s542, 2
        %s544 = smul.addr %s543, 8
        %s545 = scalar_lea.vmem %s0, %s544
        %v546 = vld [vmem:[%s545] sm:$0xff]
        %v547 = vld [vmem:[%s545 + $0x8] sm:$0xff]
        %vm550 = vcmask 1040384
        %v551 = vrot.slane %v546, 7
        %v552 = vrot.slane %v547, 7
        %v553 = vsel %vm550, %v551, %v552
        %v556 = vsel %vm550, 0.0, %v551
        %vm558 = vcmask 1046528
        %v559 = vrot.slane %v556, 1
        %v560 = vrot.slane %v553, 1
        %v561 = vsel %vm558, %v559, %v560
        %v562 = vrot.slane %v552, 1
        %v563 = vsel %vm558, %v560, %v562
        %564 = vrot.lane.b32.xlu0 %v561, 4
        %v565 = vpop.permute.xlu0 %564
        %566 = vrot.lane.b32.xlu0 %v563, 4
        %v567 = vpop.permute.xlu0 %566
        %vm570 = vcmask 31744
        %v571 = vsel %vm570, %v556, %v565
        %v572 = vsel %vm570, %v553, %v567
        %v573 = vld [vmem:[%s1] sm:$0xff]
        %v574 = vld [vmem:[%s2] sm:$0x1]
        %v576 = vperm.slane %v574, 0
        %vm578 = vcmask 64512
        %v580 = vsel %vm578, %v571, 0
        %v583 = vsel %vm578, %v572, 0
        %585 = vmatpush.msra.mxu0 0.0
        %586 = vmatpush.msra.mxu0 0.0
        %587 = vmatpush.msra.mxu0 0.0
        %588 = vmatpush.msra.mxu0 0.0
        %589 = vmatpush.msra.mxu0 0.0
        %590 = vmatpush.msra.mxu0 0.0
        %591 = vmatpush.msra.mxu0 0.0
        %592 = vmatpush.msra.mxu0 0.0
        %593 = vmatpush.msra.mxu0 0.0
        %594 = vmatpush.msra.mxu0 0.0
        %595 = vmatpush.msra.mxu0 0.0
        %596 = vmatpush.msra.mxu0 0.0
        %597 = vmatpush.msra.mxu0 0.0
        %598 = vmatpush.msra.mxu0 0.0
        %599 = vmatpush.msra.mxu0 0.0
        %600 = vmatpush.msra.mxu0 %v573
        %601 = vmatmul.f32.gmra.mxu0 %v580
        %v602 = vpop.f32.mrf.mxu0
        %v603 = vadd.f32 %v576, %v602
        %604 = vmatmul.f32.gmra.mxu0 %v583
        %v605 = vpop.f32.mrf.mxu0
        %v606 = vadd.f32 %v576, %v605
        %607 = vdwg.mxu0
        %v608 = vmax.f32 %v603, 0.0
        %v609 = vmax.f32 %v606, 0.0
        %v612 = vrot.slane %v608, 7
        %v613 = vrot.slane %v609, 7
        %v614 = vsel %vm550, %v612, %v613
        %v617 = vsel %vm550, 0.0, %v612
        %v619 = vrot.slane %v617, 1
        %v620 = vrot.slane %v614, 1
        %v621 = vsel %vm558, %v619, %v620
        %v622 = vrot.slane %v613, 1
        %v623 = vsel %vm558, %v620, %v622
        %624 = vrot.lane.b32.xlu0 %v621, 16
        %v625 = vpop.permute.xlu0 %624
        %626 = vrot.lane.b32.xlu0 %v623, 16
        %v627 = vpop.permute.xlu0 %626
        %vm630 = vcmask 130048
        %v631 = vsel %vm630, %v617, %v625
        %v632 = vsel %vm630, %v614, %v627
        %v633 = vld [vmem:[%s3] sm:$0xff]
        %v634 = vld [vmem:[%s3 + $0x8] sm:$0xff]
        %v635 = vld [vmem:[%s3 + $0x10] sm:$0xff]
        %v636 = vld [vmem:[%s3 + $0x18] sm:$0xff]
        %v637 = vld [vmem:[%s4] sm:$0x1]
        %v639 = vperm.slane %v637, 0
        %vm641 = vcmask 261120
        %v643 = vsel %vm641, %v631, 0
        %v646 = vsel %vm641, %v632, 0
        %648 = vmatpush.msra.mxu0 0.0
        %649 = vmatpush.msra.mxu0 0.0
        %650 = vmatpush.msra.mxu0 0.0
        %651 = vmatpush.msra.mxu0 0.0
        %652 = vmatpush.msra.mxu0 0.0
        %653 = vmatpush.msra.mxu0 0.0
        %654 = vmatpush.msra.mxu0 0.0
        %655 = vmatpush.msra.mxu0 0.0
        %656 = vmatpush.msra.mxu0 0.0
        %657 = vmatpush.msra.mxu0 0.0
        %658 = vmatpush.msra.mxu0 0.0
        %659 = vmatpush.msra.mxu0 0.0
        %660 = vmatpush.msra.mxu0 %v636
        %661 = vmatpush.msra.mxu0 %v635
        %662 = vmatpush.msra.mxu0 %v634
        %663 = vmatpush.msra.mxu0 %v633
        %664 = vmatmul.f32.gmra.mxu0 %v643
        %v665 = vpop.f32.mrf.mxu0
        %v666 = vadd.f32 %v639, %v665
        %667 = vmatmul.f32.gmra.mxu0 %v646
        %v668 = vpop.f32.mrf.mxu0
        %v669 = vadd.f32 %v639, %v668
        %670 = vdwg.mxu0
        %v671 = vmax.f32 %v666, 0.0
        %v672 = vmax.f32 %v669, 0.0
        %v673 = vld [vmem:[%s5] sm:$0xf]
        %v674 = vld [vmem:[%s6] sm:$0x1]
        %v676 = vperm.slane %v674, 0
        %v678 = vsel %vm570, %v546, 0
        %v680 = vsel %vm570, %v547, 0
        %vm682 = vcmask 1043456
        %v684 = vsel %vm682, %v673, 0
        %686 = vmatpush.msra.mxu0 0.0
        %687 = vmatpush.msra.mxu0 0.0
        %688 = vmatpush.msra.mxu0 0.0
        %689 = vmatpush.msra.mxu0 0.0
        %690 = vmatpush.msra.mxu0 0.0
        %691 = vmatpush.msra.mxu0 0.0
        %692 = vmatpush.msra.mxu0 0.0
        %693 = vmatpush.msra.mxu0 0.0
        %694 = vmatpush.msra.mxu0 0.0
        %695 = vmatpush.msra.mxu0 0.0
        %696 = vmatpush.msra.mxu0 0.0
        %697 = vmatpush.msra.mxu0 0.0
        %698 = vmatpush.msra.mxu0 0.0
        %699 = vmatpush.msra.mxu0 0.0
        %700 = vmatpush.msra.mxu0 0.0
        %701 = vmatpush.msra.mxu0 %v684
        %702 = vmatmul.f32.gmra.mxu0 %v678
        %v703 = vpop.f32.mrf.mxu0
        %v704 = vadd.f32 %v676, %v703
        %705 = vmatmul.f32.gmra.mxu0 %v680
        %v706 = vpop.f32.mrf.mxu0
        %v707 = vadd.f32 %v676, %v706
        %708 = vdwg.mxu0
        %v709 = vadd.f32 %v671, %v704
        %v710 = vadd.f32 %v672, %v707
        %v711 = vmax.f32 %v709, 0.0
        %v712 = vmax.f32 %v710, 0.0
        %vm715 = vcmask 1041408
        %v716 = vrot.slane %v711, 6
        %v717 = vrot.slane %v712, 6
        %v718 = vsel %vm715, %v716, %v717
        %v721 = vsel %vm715, 0.0, %v716
        %vm723 = vcmask 1045504
        %v724 = vrot.slane %v721, 2
        %v725 = vrot.slane %v718, 2
        %v726 = vsel %vm723, %v724, %v725
        %v727 = vrot.slane %v717, 2
        %v728 = vsel %vm723, %v725, %v727
        %729 = vrot.lane.b32.xlu0 %v726, 16
        %v730 = vpop.permute.xlu0 %729
        %731 = vrot.lane.b32.xlu0 %v728, 16
        %v732 = vpop.permute.xlu0 %731
        %v735 = vsel %vm630, %v721, %v730
        %v736 = vsel %vm630, %v718, %v732
        %v737 = vld [vmem:[%s7] sm:$0xff]
        %v738 = vld [vmem:[%s7 + $0x8] sm:$0xff]
        %v739 = vld [vmem:[%s7 + $0x10] sm:$0xff]
        %v740 = vld [vmem:[%s7 + $0x18] sm:$0xff]
        %v741 = vld [vmem:[%s8] sm:$0x1]
        %v743 = vperm.slane %v741, 0
        %v746 = vsel %vm641, %v735, 0
        %v749 = vsel %vm641, %v736, 0
        %751 = vmatpush.msra.mxu0 0.0
        %752 = vmatpush.msra.mxu0 0.0
        %753 = vmatpush.msra.mxu0 0.0
        %754 = vmatpush.msra.mxu0 0.0
        %755 = vmatpush.msra.mxu0 0.0
        %756 = vmatpush.msra.mxu0 0.0
        %757 = vmatpush.msra.mxu0 0.0
        %758 = vmatpush.msra.mxu0 0.0
        %759 = vmatpush.msra.mxu0 0.0
        %760 = vmatpush.msra.mxu0 0.0
        %761 = vmatpush.msra.mxu0 0.0
        %762 = vmatpush.msra.mxu0 0.0
        %763 = vmatpush.msra.mxu0 %v740
        %764 = vmatpush.msra.mxu0 %v739
        %765 = vmatpush.msra.mxu0 %v738
        %766 = vmatpush.msra.mxu0 %v737
        %767 = vmatmul.f32.gmra.mxu0 %v746
        %v768 = vpop.f32.mrf.mxu0
        %v769 = vadd.f32 %v743, %v768
        %770 = vmatmul.f32.gmra.mxu0 %v749
        %v771 = vpop.f32.mrf.mxu0
        %v772 = vadd.f32 %v743, %v771
        %773 = vdwg.mxu0
        %v774 = vmax.f32 %v769, 0.0
        %v775 = vmax.f32 %v772, 0.0
        %v778 = vrot.slane %v774, 6
        %v779 = vrot.slane %v775, 6
        %v780 = vsel %vm715, %v778, %v779
        %v783 = vsel %vm715, 0.0, %v778
        %v785 = vrot.slane %v783, 2
        %v786 = vrot.slane %v780, 2
        %v787 = vsel %vm723, %v785, %v786
        %v788 = vrot.slane %v779, 2
        %v789 = vsel %vm723, %v786, %v788
        %790 = vrot.lane.b32.xlu0 %v787, 16
        %v791 = vpop.permute.xlu0 %790
        %792 = vrot.lane.b32.xlu0 %v789, 16
        %v793 = vpop.permute.xlu0 %792
        %v796 = vsel %vm630, %v783, %v791
        %v797 = vsel %vm630, %v780, %v793
        %v798 = vld [vmem:[%s9] sm:$0xff]
        %v799 = vld [vmem:[%s9 + $0x8] sm:$0xff]
        %v800 = vld [vmem:[%s9 + $0x10] sm:$0xff]
        %v801 = vld [vmem:[%s9 + $0x18] sm:$0xff]
        %v802 = vld [vmem:[%s10] sm:$0x1]
        %v804 = vperm.slane %v802, 0
        %v807 = vsel %vm641, %v796, 0
        %v810 = vsel %vm641, %v797, 0
        %812 = vmatpush.msra.mxu0 0.0
        %813 = vmatpush.msra.mxu0 0.0
        %814 = vmatpush.msra.mxu0 0.0
        %815 = vmatpush.msra.mxu0 0.0
        %816 = vmatpush.msra.mxu0 0.0
        %817 = vmatpush.msra.mxu0 0.0
        %818 = vmatpush.msra.mxu0 0.0
        %819 = vmatpush.msra.mxu0 0.0
        %820 = vmatpush.msra.mxu0 0.0
        %821 = vmatpush.msra.mxu0 0.0
        %822 = vmatpush.msra.mxu0 0.0
        %823 = vmatpush.msra.mxu0 0.0
        %824 = vmatpush.msra.mxu0 %v801
        %825 = vmatpush.msra.mxu0 %v800
        %826 = vmatpush.msra.mxu0 %v799
        %827 = vmatpush.msra.mxu0 %v798
        %828 = vmatmul.f32.gmra.mxu0 %v807
        %v829 = vpop.f32.mrf.mxu0
        %v830 = vadd.f32 %v804, %v829
        %831 = vmatmul.f32.gmra.mxu0 %v810
        %v832 = vpop.f32.mrf.mxu0
        %v833 = vadd.f32 %v804, %v832
        %834 = vdwg.mxu0
        %v835 = vmax.f32 %v830, 0.0
        %v836 = vmax.f32 %v833, 0.0
        %v837 = vadd.f32 %v835, %v711
        %v838 = vadd.f32 %v836, %v712
        %v839 = vmax.f32 %v837, 0.0
        %v840 = vmax.f32 %v838, 0.0
        %v843 = vrot.slane %v839, 4
        %v844 = vrot.slane %v840, 4
        %v845 = vsel %vm682, %v843, %v844
        %v848 = vsel %vm682, 0.0, %v843
        %v850 = vrot.slane %v848, 4
        %v851 = vrot.slane %v845, 4
        %v852 = vsel %vm682, %v850, %v851
        %v853 = vrot.slane %v844, 4
        %v854 = vsel %vm682, %v851, %v853
        %855 = vrot.lane.b32.xlu0 %v852, 16
        %v856 = vpop.permute.xlu0 %855
        %857 = vrot.lane.b32.xlu0 %v854, 16
        %v858 = vpop.permute.xlu0 %857
        %v861 = vsel %vm630, %v848, %v856
        %v862 = vsel %vm630, %v845, %v858
        %v863 = vld [vmem:[%s11] sm:$0xff]
        %v864 = vld [vmem:[%s11 + $0x8] sm:$0xff]
        %v865 = vld [vmem:[%s11 + $0x10] sm:$0xff]
        %v866 = vld [vmem:[%s11 + $0x18] sm:$0xff]
        %v867 = vld [vmem:[%s12] sm:$0x1]
        %v869 = vperm.slane %v867, 0
        %v872 = vsel %vm641, %v861, 0
        %v875 = vsel %vm641, %v862, 0
        %877 = vmatpush.msra.mxu0 0.0
        %878 = vmatpush.msra.mxu0 0.0
        %879 = vmatpush.msra.mxu0 0.0
        %880 = vmatpush.msra.mxu0 0.0
        %881 = vmatpush.msra.mxu0 0.0
        %882 = vmatpush.msra.mxu0 0.0
        %883 = vmatpush.msra.mxu0 0.0
        %884 = vmatpush.msra.mxu0 0.0
        %885 = vmatpush.msra.mxu0 0.0
        %886 = vmatpush.msra.mxu0 0.0
        %887 = vmatpush.msra.mxu0 0.0
        %888 = vmatpush.msra.mxu0 0.0
        %889 = vmatpush.msra.mxu0 %v866
        %890 = vmatpush.msra.mxu0 %v865
        %891 = vmatpush.msra.mxu0 %v864
        %892 = vmatpush.msra.mxu0 %v863
        %893 = vmatmul.f32.gmra.mxu0 %v872
        %v894 = vpop.f32.mrf.mxu0
        %v895 = vadd.f32 %v869, %v894
        %896 = vmatmul.f32.gmra.mxu0 %v875
        %v897 = vpop.f32.mrf.mxu0
        %v898 = vadd.f32 %v869, %v897
        %899 = vdwg.mxu0
        %v900 = vmax.f32 %v895, 0.0
        %v901 = vmax.f32 %v898, 0.0
        %v904 = vrot.slane %v900, 4
        %v905 = vrot.slane %v901, 4
        %v906 = vsel %vm682, %v904, %v905
        %v909 = vsel %vm682, 0.0, %v904
        %v911 = vrot.slane %v909, 4
        %v912 = vrot.slane %v906, 4
        %v913 = vsel %vm682, %v911, %v912
        %v914 = vrot.slane %v905, 4
        %v915 = vsel %vm682, %v912, %v914
        %916 = vrot.lane.b32.xlu0 %v913, 16
        %v917 = vpop.permute.xlu0 %916
        %918 = vrot.lane.b32.xlu0 %v915, 16
        %v919 = vpop.permute.xlu0 %918
        %v922 = vsel %vm630, %v909, %v917
        %v923 = vsel %vm630, %v906, %v919
        %v924 = vld [vmem:[%s13] sm:$0xff]
        %v925 = vld [vmem:[%s13 + $0x8] sm:$0xff]
        %v926 = vld [vmem:[%s13 + $0x10] sm:$0xff]
        %v927 = vld [vmem:[%s13 + $0x18] sm:$0xff]
        %v928 = vld [vmem:[%s14] sm:$0x1]
        %v930 = vperm.slane %v928, 0
        %v933 = vsel %vm641, %v922, 0
        %v936 = vsel %vm641, %v923, 0
        %938 = vmatpush.msra.mxu0 0.0
        %939 = vmatpush.msra.mxu0 0.0
        %940 = vmatpush.msra.mxu0 0.0
        %941 = vmatpush.msra.mxu0 0.0
        %942 = vmatpush.msra.mxu0 0.0
        %943 = vmatpush.msra.mxu0 0.0
        %944 = vmatpush.msra.mxu0 0.0
        %945 = vmatpush.msra.mxu0 0.0
        %946 = vmatpush.msra.mxu0 0.0
        %947 = vmatpush.msra.mxu0 0.0
        %948 = vmatpush.msra.mxu0 0.0
        %949 = vmatpush.msra.mxu0 0.0
        %950 = vmatpush.msra.mxu0 %v927
        %951 = vmatpush.msra.mxu0 %v926
        %952 = vmatpush.msra.mxu0 %v925
        %953 = vmatpush.msra.mxu0 %v924
        %954 = vmatmul.f32.gmra.mxu0 %v933
        %v955 = vpop.f32.mrf.mxu0
        %956 = vmatmul.f32.gmra.mxu0 %v936
        %v957 = vpop.f32.mrf.mxu0
        %v958 = vadd.f32 %v930, %v957
        %959 = vdwg.mxu0
        %v960 = vmax.f32 %v958, 0.0
        %v961 = vadd.f32 %v960, %v840
        %v962 = vmax.f32 %v961, 0.0
        %v963 = vld [vmem:[%s15] sm:$0xff]
        %v964 = vld [vmem:[%s15 + $0x8] sm:$0xff]
        %v965 = vld [vmem:[%s16] sm:$0x1]
        %v967 = vrot.slane %v962, 7
        %v968 = vsel %vm630, %v967, 0
        %970 = vmatpush.msra.mxu0 0.0
        %971 = vmatpush.msra.mxu0 0.0
        %972 = vmatpush.msra.mxu0 0.0
        %973 = vmatpush.msra.mxu0 0.0
        %974 = vmatpush.msra.mxu0 0.0
        %975 = vmatpush.msra.mxu0 0.0
        %976 = vmatpush.msra.mxu0 0.0
        %977 = vmatpush.msra.mxu0 0.0
        %978 = vmatpush.msra.mxu0 0.0
        %979 = vmatpush.msra.mxu0 0.0
        %980 = vmatpush.msra.mxu0 0.0
        %981 = vmatpush.msra.mxu0 0.0
        %982 = vmatpush.msra.mxu0 0.0
        %983 = vmatpush.msra.mxu0 0.0
        %984 = vmatpush.msra.mxu0 %v964
        %985 = vmatpush.msra.mxu0 %v963
        %986 = vmatmul.f32.gmra.mxu0 %v968
        %v987 = vpop.f32.mrf.mxu0
        %v988 = vadd.f32 %v965, %v987
        %989 = vdwg.mxu0
        %vm990 = vcmask 57344
        %v991 = vsel %vm990, %v988, -inf
        %992 = vmax.xlane.f32.xlu0 %v991
        %v993 = vpop.xlane.xlu0 %992
        %v994 = vsub.f32 %v988, %v993
        %v995 = vmul.f32 %v994, 1.442695
        %v996 = vpow.pop %v995
        %v997 = vsel %vm990, %v996, 0.0
        %998 = vadd.xlane.f32.xlu0 %v997
        %v999 = vpop.xlane.xlu0 %998
        %v1000 = vlog2.pop %v999
        %v1001 = vmul.f32 %v1000, 0.6931472
        %v1002 = vadd.f32 %v993, %v1001
        %v1003 = vsub.f32 %v988, %v1002
        %1004 = vst.msk [vmem:[%s540] sm:$0x1] %vm990, %v1003
        %s1005 = sand.u32 %s401, 1
        %s1006 = scalar_lea.sflag [#allocation3], %s1005
        %s1007 = sand.u32 %s401, 1
        %s1008 = scalar_lea.vmem [#allocation2], %s1007
        // Predicated region
        $region89: #{tpu_custom_call.1} parent=87 // pred_check
          %p1009 = pneg %p411
        $region90: #{tpu_custom_call.1} parent=87 // pred_check_branch
          %1011 = sbr.rel (%p1009) target = $region92
        $region91: #{tpu_custom_call.1} parent=87 // pred_region
          %1013 = vsyncadd %s1006, 0
          %s1014 = scalar_lea.hbm %s17, %s31
          %s1016 = sshll.u32 %s1008, 4
          %s1017 = int_to_ptr.vmem [resolvable:$true] %s1016
          %s1018 = sshll.u32 %s1014, 4
          %s1019 = int_to_ptr.hbm [resolvable:$true] %s1018
          %1021 = dma.vmem_to_hbm [thread:$0]  %s1017, 16, %s1019, %s1006
        $region92: #{tpu_custom_call.1} parent=87 // pred_fallthru
          _
      $region88: #{tpu_custom_call.1} parent=5 // pred_fallthru
        _
      %p1022 = scmp.le.s32.totalorder 2, %s26
      // Predicated region
      $region93: #{tpu_custom_call.1} parent=5 // pred_check
        %p1023 = pneg %p1022
      $region94: #{tpu_custom_call.1} parent=5 // pred_check_branch
        %1025 = sbr.rel (%p1023) target = $region96
      $region95: #{tpu_custom_call.1} parent=5 // pred_region
        %s1026 = ssub.s32 %s26, 2
        // Predicated region
        $region97: #{tpu_custom_call.1} parent=95 // pred_check
          %p1027 = pneg %p417
        $region98: #{tpu_custom_call.1} parent=95 // pred_check_branch
          %1029 = sbr.rel (%p1027) target = $region100
        $region99: #{tpu_custom_call.1} parent=95 // pred_region
          %s1030 = sand.u32 %s402, 1
          %s1031 = scalar_lea.sflag [#allocation3], %s1030
          %s1032 = sand.u32 %s402, 1
          %s1033 = scalar_lea.vmem [#allocation2], %s1032
          %1035 = dma.done %s1031, 16
        $region100: #{tpu_custom_call.1} parent=95 // pred_fallthru
          _
      $region96: #{tpu_custom_call.1} parent=5 // pred_fallthru
        _
    $region6: #{tpu_custom_call.1} parent=1 // loop_footer
      %s30 = sadd.s32 1, %s26
    $region7: #{tpu_custom_call.1} parent=1 // loop_footer_branch
      %25 = sbr.rel target = $region3
    $region8: #{tpu_custom_call.1} parent=1 // loop_exit
      _
    %1036 = vsyncpa [#allocation3], 1
    %s1037 = scalar_lea.sflag [#allocation3], 1
    %1038 = vsyncpa %s1037, 1

</llo_original>
